<compile_context>
chip_gen: v7x
topology: tpu7x:2x2x1
jax: 0.10.0
libtpu: 0.0.40
codegen_flags: <defaults>
</compile_context>

<pallas_src>
import functools

import jax
import jax.numpy as jnp
from jax.experimental import pallas as pl
from jax.experimental.pallas import tpu as pltpu


def _round_up(x, m):
    return (x + m - 1) // m * m


def _fc_classifier_kernel(x_ref, w0_ref, b0_ref, w1_ref, b1_ref, o_ref):
    """One (batch-tile, hidden-tile) step of Linear -> ReLU -> Linear.

    x_ref:  [TB, Fp]  bf16    (batch tile, full input features)
    w0_ref: [Fp, TK]  bf16    (hidden-column tile of classifier0 weight)
    b0_ref: [1,  TK]  f32
    w1_ref: [TK, Cp]  bf16    (hidden-row tile of classifier1 weight)
    b1_ref: [1,  Cp]  f32
    o_ref:  [TB, Cp]  f32     (resident across the hidden axis -> accumulator)
    """
    k = pl.program_id(1)

    @pl.when(k == 0)
    def _():
        # Seed the logits with the output bias once per batch tile.
        o_ref[...] = jnp.broadcast_to(b1_ref[...], o_ref.shape)

    # classifier0 partial: [TB, Fp] @ [Fp, TK] -> [TB, TK], f32 accumulation.
    h = jnp.dot(x_ref[...], w0_ref[...], preferred_element_type=jnp.float32)
    h = jnp.maximum(h + b0_ref[...], 0.0)          # bias + ReLU
    # TODO(synk): training-mode dropout (pltpu.prng_random_bits mask + 1/(1-p)
    # scale) not wired in; nn.Dropout is identity at inference.

    # classifier1 partial sum accumulated into the resident f32 output block.
    o_ref[...] += jnp.dot(h.astype(w1_ref.dtype), w1_ref[...],
                          preferred_element_type=jnp.float32)


def _pick_tb(B8, block_b, max_waste=1.125):
    """Largest batch tile <= block_b that keeps batch padding <= ~12.5%."""
    cands = [c for c in (1024, 768, 512, 384, 256, 128, 64, 32, 16, 8)
             if c <= block_b]
    for c in cands:                         # descending -> first hit is largest
        if _round_up(B8, c) <= max_waste * B8:
            return c
    return 8                                # minimal-padding fallback


@functools.partial(
    jax.jit,
    static_argnames=("n_classes", "block_b", "block_k", "vmem_limit_bytes",
                     "split_batch_for_megacore"))
def _fc_forward_padded(x, w0_p, b0_p, w1_p, b1_p, *, n_classes, block_b,
                       block_k, vmem_limit_bytes, split_batch_for_megacore):
    B, F_in = x.shape
    Fp = w0_p.shape[0]
    Cp = w1_p.shape[1]

    # Clamp user tile requests to (8, 128)-legal values.
    block_b = max(8, (int(block_b) // 8) * 8)
    block_k = max(128, (int(block_k) // 128) * 128)

    # --- Batch tiling: bounded padding waste. ---
    B8 = _round_up(B, 8)
    TB = _pick_tb(B8, block_b)
    # v7x megacore: when everything fits in one big batch tile, split it so the
    # "parallel" grid axis has >= 2 entries and both TensorCores get work.
    if split_batch_for_megacore and _round_up(B8, TB) // TB == 1 and TB >= 512:
        TB //= 2

    # --- Hidden tiling: largest TK (<= block_k) dividing Fp within VMEM. ---
    def _ws_bytes(tb, tk):
        # double-buffered bf16 x / w0 / w1 blocks + double-buffered f32 output
        # block (used as accumulator) + biases.
        return (2 * tb * Fp * 2 + 2 * Fp * tk * 2 + 2 * tk * Cp * 2
                + 2 * tb * Cp * 4 + 2 * (tk + Cp) * 4)

    budget = int(0.85 * vmem_limit_bytes)
    while TB > 8 and _ws_bytes(TB, 128) > budget:
        TB = max(8, TB // 2)
    Bp = _round_up(B8, TB)

    TK = 128
    for cand in (1024, 512, 256, 128):
        if cand <= block_k and Fp % cand == 0 and _ws_bytes(TB, cand) <= budget:
            TK = cand
            break

    grid = (Bp // TB, Fp // TK)

    # Only x is padded / cast per call; weights were prepared once up front.
    # Zero padding is semantics-preserving (zero rows/cols contribute nothing;
    # padded batch rows / output cols are sliced away below).
    x_p = jnp.pad(x, ((0, Bp - B), (0, Fp - F_in))).astype(jnp.bfloat16)

    weight_bytes = (w0_p.size + w1_p.size) * 2 + (b0_p.size + b1_p.size) * 4

    out = pl.pallas_call(
        _fc_classifier_kernel,
        out_shape=jax.ShapeDtypeStruct((Bp, Cp), jnp.float32),
        grid_spec=pltpu.PrefetchScalarGridSpec(
            num_scalar_prefetch=0,
            grid=grid,
            in_specs=[
                pl.BlockSpec((TB, Fp), lambda i, k: (i, 0)),   # x: batch tile
                pl.BlockSpec((Fp, TK), lambda i, k: (0, k)),   # w0: hidden cols
                pl.BlockSpec((1, TK), lambda i, k: (0, k)),    # b0: hidden cols
                pl.BlockSpec((TK, Cp), lambda i, k: (k, 0)),   # w1: hidden rows
                pl.BlockSpec((1, Cp), lambda i, k: (0, 0)),    # b1: invariant
            ],
            out_specs=pl.BlockSpec((TB, Cp), lambda i, k: (i, 0)),
        ),
        compiler_params=pltpu.CompilerParams(
            dimension_semantics=("parallel", "arbitrary"),
            vmem_limit_bytes=vmem_limit_bytes,
        ),
        cost_estimate=pl.CostEstimate(
            flops=2 * Bp * Fp * (Fp + Cp),
            transcendentals=0,
            # Weights are re-streamed once per batch tile (grid[0] passes).
            bytes_accessed=(x_p.size * 2 + grid[0] * weight_bytes
                            + Bp * Cp * 4),
        ),
    )(x_p, w0_p, b0_p, w1_p, b1_p)

    return out[:B, :n_classes]


def prepare_fc_classifier_params(w0, b0, w1, b1):
    """One-time weight prep: pad to lane-dense shapes and cast to bf16.

    Hoisted out of the per-call forward so XLA does not re-copy ~4*F^2 bytes
    of weights on every call.  w0 [F, F] and w1 [F, C] are the pre-transposed
    ([in, out]) PyTorch weights; biases stay f32.
    """
    F = w0.shape[0]
    C = w1.shape[1]
    Fp = _round_up(F, 128)                 # input + hidden feature width
    Cp = _round_up(C, 128)                 # lane-dense output stores
    w0_p = jnp.pad(w0, ((0, Fp - F), (0, Fp - F))).astype(jnp.bfloat16)
    w1_p = jnp.pad(w1, ((0, Fp - F), (0, Cp - C))).astype(jnp.bfloat16)
    b0_p = jnp.pad(b0.reshape(1, -1).astype(jnp.float32), ((0, 0), (0, Fp - F)))
    b1_p = jnp.pad(b1.reshape(1, -1).astype(jnp.float32), ((0, 0), (0, Cp - C)))
    return {"w0": w0_p, "b0": b0_p, "w1": w1_p, "b1": b1_p,
            "n_features": F, "n_classes": C}


def fc_classifier_forward(x, params, *, block_b=512, block_k=512):
    """x: [B, n_features] f32 -> logits [B, n_classes] f32."""
    try:
        kind = jax.devices()[0].device_kind.lower()
    except Exception:
        kind = ""
    is_v7 = "v7" in kind
    # v7x: 64 MiB physical VMEM -> cap at 48 MiB; v5e/v6e: 128 MiB physical,
    # but scoped default is only 16/32 MiB -> raise to 96 MiB.
    vmem_limit = (48 << 20) if is_v7 else (96 << 20)
    return _fc_forward_padded(
        x, params["w0"], params["b0"], params["w1"], params["b1"],
        n_classes=params["n_classes"],
        block_b=block_b, block_k=block_k,
        vmem_limit_bytes=vmem_limit,
        split_batch_for_megacore=is_v7)


def init_fc_classifier_params(key, n_features, n_classes):
    """Mirror FCClassifier.__init__: weights ~ N(0, 0.02), biases zero.
    Weights are returned pre-transposed [in, out] in f32; padding / bf16 cast
    happens once in prepare_fc_classifier_params."""
    k0, k1 = jax.random.split(key)
    # PyTorch weight shapes: classifier0 [F, F], classifier1 [C, F]; store W.T.
    w0 = (0.02 * jax.random.normal(k0, (n_features, n_features))).T
    b0 = jnp.zeros((n_features,), jnp.float32)
    w1 = (0.02 * jax.random.normal(k1, (n_classes, n_features))).T
    b1 = jnp.zeros((n_classes,), jnp.float32)
    return w0, b0, w1, b1


if __name__ == "__main__":
    B, F, C = 8, 128, 8            # batch, n_features, n_classes
    key = jax.random.PRNGKey(0)
    kx, kp = jax.random.split(key)

    x = jax.random.normal(kx, (B, F), dtype=jnp.float32)
    w0, b0, w1, b1 = init_fc_classifier_params(kp, F, C)
    params = prepare_fc_classifier_params(w0, b0, w1, b1)

    logits = fc_classifier_forward(x, params)
    logits = jax.block_until_ready(logits)

    # Pure-JAX reference mirroring the kernel's bf16-matmul / f32-accumulate
    # math (fp32-weight parity diverges slightly by design; bf16 is the MXU path).
    h_ref = jnp.maximum(
        jnp.dot(x.astype(jnp.bfloat16), w0.astype(jnp.bfloat16),
                preferred_element_type=jnp.float32) + b0[None, :], 0.0)
    logits_ref = (jnp.dot(h_ref.astype(jnp.bfloat16), w1.astype(jnp.bfloat16),
                          preferred_element_type=jnp.float32) + b1[None, :])

    assert logits.shape == (B, C)
    assert jnp.allclose(logits, logits_ref, atol=2e-3, rtol=2e-3), (
        float(jnp.max(jnp.abs(logits - logits_ref))))

    print("KERNEL_OK")
</pallas_src>

<mosaic_0001>
module attributes {stable_mosaic.version = 11 : i64} {
  func.func @_fc_classifier_kernel(%arg0: i32, %arg1: i32, %arg2: memref<8x128xbf16, #tpu.memory_space<vmem>>, %arg3: memref<128x128xbf16, #tpu.memory_space<vmem>>, %arg4: memref<1x128xf32, #tpu.memory_space<vmem>>, %arg5: memref<128x128xbf16, #tpu.memory_space<vmem>>, %arg6: memref<1x128xf32, #tpu.memory_space<vmem>>, %arg7: memref<8x128xf32, #tpu.memory_space<vmem>>) attributes {dimension_semantics = [#tpu.dimension_semantics<parallel>, #tpu.dimension_semantics<arbitrary>], iteration_bounds = array<i64: 1, 1>, scalar_prefetch = 0 : i64, scratch_operands = 0 : i64, tpu.core_type = #tpu.core_type<tc>, window_params = [{transform_indices = @transform_0, window_bounds = array<i64: 8, 128>}, {transform_indices = @transform_1, window_bounds = array<i64: 128, 128>}, {transform_indices = @transform_2, window_bounds = array<i64: 1, 128>}, {transform_indices = @transform_3, window_bounds = array<i64: 128, 128>}, {pipeline_mode = #tpu.pipeline_mode<synchronous>, transform_indices = @transform_4, window_bounds = array<i64: 1, 128>}, {transform_indices = @transform_5, window_bounds = array<i64: 8, 128>}]} {
    %c0_i32 = arith.constant 0 : i32
    %0 = arith.cmpi eq, %arg1, %c0_i32 : i32
    %1 = arith.extui %0 : i1 to i32
    %c0_i32_0 = arith.constant 0 : i32
    %2 = arith.cmpi ne, %1, %c0_i32_0 : i32
    scf.if %2 {
      %c0_14 = arith.constant 0 : index
      %c0_15 = arith.constant 0 : index
      %17 = vector.load %arg6[%c0_14, %c0_15] : memref<1x128xf32, #tpu.memory_space<vmem>>, vector<1x128xf32>
      %18 = vector.shape_cast %17 : vector<1x128xf32> to vector<1x128xf32>
      %19 = vector.broadcast %18 : vector<1x128xf32> to vector<8x128xf32>
      %c0_16 = arith.constant 0 : index
      %c0_17 = arith.constant 0 : index
      %20 = vector.load %arg7[%c0_16, %c0_17] : memref<8x128xf32, #tpu.memory_space<vmem>>, vector<8x128xf32>
      tpu.vector_store %arg7[%c0_16, %c0_17], %19 {strides = array<i32>} : memref<8x128xf32, #tpu.memory_space<vmem>>, vector<8x128xf32>,
    } else {
    }
    %c0 = arith.constant 0 : index
    %c0_1 = arith.constant 0 : index
    %3 = vector.load %arg2[%c0, %c0_1] : memref<8x128xbf16, #tpu.memory_space<vmem>>, vector<8x128xbf16>
    %c0_2 = arith.constant 0 : index
    %c0_3 = arith.constant 0 : index
    %4 = vector.load %arg3[%c0_2, %c0_3] : memref<128x128xbf16, #tpu.memory_space<vmem>>, vector<128x128xbf16>
    %cst = arith.constant dense<0.000000e+00> : vector<8x128xf32>
    %5 = tpu.matmul %3, %4, %cst {dimension_numbers = #tpu.dot_dimension_numbers<[1], [0], [0], [1], [0, 0, 1, 1], [], []>} : vector<8x128xbf16>, vector<128x128xbf16>, vector<8x128xf32> -> vector<8x128xf32>
    %c0_4 = arith.constant 0 : index
    %c0_5 = arith.constant 0 : index
    %6 = vector.load %arg4[%c0_4, %c0_5] : memref<1x128xf32, #tpu.memory_space<vmem>>, vector<1x128xf32>
    %7 = vector.broadcast %6 : vector<1x128xf32> to vector<8x128xf32>
    %8 = arith.addf %5, %7 : vector<8x128xf32>
    %cst_6 = arith.constant 0.000000e+00 : f32
    %9 = vector.broadcast %cst_6 : f32 to vector<8x128xf32>
    %10 = arith.maximumf %8, %9 : vector<8x128xf32>
    %c0_7 = arith.constant 0 : index
    %c0_8 = arith.constant 0 : index
    %11 = vector.load %arg7[%c0_7, %c0_8] : memref<8x128xf32, #tpu.memory_space<vmem>>, vector<8x128xf32>
    %12 = arith.truncf %10 : vector<8x128xf32> to vector<8x128xbf16>
    %c0_9 = arith.constant 0 : index
    %c0_10 = arith.constant 0 : index
    %13 = vector.load %arg5[%c0_9, %c0_10] : memref<128x128xbf16, #tpu.memory_space<vmem>>, vector<128x128xbf16>
    %cst_11 = arith.constant dense<0.000000e+00> : vector<8x128xf32>
    %14 = tpu.matmul %12, %13, %cst_11 {dimension_numbers = #tpu.dot_dimension_numbers<[1], [0], [0], [1], [0, 0, 1, 1], [], []>} : vector<8x128xbf16>, vector<128x128xbf16>, vector<8x128xf32> -> vector<8x128xf32>
    %15 = arith.addf %11, %14 : vector<8x128xf32>
    %c0_12 = arith.constant 0 : index
    %c0_13 = arith.constant 0 : index
    %16 = vector.load %arg7[%c0_12, %c0_13] : memref<8x128xf32, #tpu.memory_space<vmem>>, vector<8x128xf32>
    tpu.vector_store %arg7[%c0_12, %c0_13], %15 {strides = array<i32>} : memref<8x128xf32, #tpu.memory_space<vmem>>, vector<8x128xf32>,
    return
  }
  func.func @transform_0(%arg0: i32, %arg1: i32) -> (i32, i32) {
    %c0_i32 = arith.constant 0 : i32
    %c0_i32_0 = arith.constant 0 : i32
    return %arg0, %c0_i32 : i32, i32
  }
  func.func @transform_1(%arg0: i32, %arg1: i32) -> (i32, i32) {
    %c0_i32 = arith.constant 0 : i32
    %c0_i32_0 = arith.constant 0 : i32
    return %c0_i32, %arg1 : i32, i32
  }
  func.func @transform_2(%arg0: i32, %arg1: i32) -> (i32, i32) {
    %c0_i32 = arith.constant 0 : i32
    %c0_i32_0 = arith.constant 0 : i32
    return %c0_i32, %arg1 : i32, i32
  }
  func.func @transform_3(%arg0: i32, %arg1: i32) -> (i32, i32) {
    %c0_i32 = arith.constant 0 : i32
    %c0_i32_0 = arith.constant 0 : i32
    return %arg1, %c0_i32 : i32, i32
  }
  func.func @transform_4(%arg0: i32, %arg1: i32) -> (i32, i32) {
    %c0_i32 = arith.constant 0 : i32
    %c0_i32_0 = arith.constant 0 : i32
    %c0_i32_1 = arith.constant 0 : i32
    return %c0_i32, %c0_i32_0 : i32, i32
  }
  func.func @transform_5(%arg0: i32, %arg1: i32) -> (i32, i32) {
    %c0_i32 = arith.constant 0 : i32
    %c0_i32_0 = arith.constant 0 : i32
    return %arg0, %c0_i32 : i32, i32
  }
}

</mosaic_0001>

<llo_original>
// kernel: _fc_forward_padded.1
$region0: #{_fc_forward_padded.1}
  #allocation0 [shape = 'u32[]', space=smem, size = 0x4, offset = 0x4, fixed_abs, tag = 'smem constant byte address 0x4 - core index']
  #allocation1 [shape = 'u32[144,128]{1,0:T(1,128)}', space=vmem, size = 0x12000, scoped, tag = 'internal scratch']
  %s0 = inlined_call_operand.hbm [shape: bf16[8,128], index: 0, kind: input, shape index: {}]
  %s1 = inlined_call_operand.hbm [shape: bf16[128,128], index: 1, kind: input, shape index: {}]
  %s2 = inlined_call_operand.hbm [shape: f32[1,128], index: 2, kind: input, shape index: {}]
  %s3 = inlined_call_operand.hbm [shape: bf16[128,128], index: 3, kind: input, shape index: {}]
  %s4 = inlined_call_operand.hbm [shape: f32[1,128], index: 4, kind: input, shape index: {}]
  %s5 = inlined_call_operand.hbm [shape: f32[8,128], index: 5, kind: output, shape index: {}]
  %s6 = sld [smem:[#allocation0]]
  $region54: #{_fc_forward_padded.1} parent=0
    _
  %s8 = ssub.s32 1, %s6
  %s9 = scalar_select 0, %s8, %s6
  $region1: #{_fc_forward_padded.1} parent=0
    #allocation2 [shape = 'u8[2048]{0}', space=vmem, size = 0x800, scoped, tag = 'input window, operand 0, single buffered']
    #allocation3 [shape = 's32[1]{0}', space=sflag, size = 0x4, scoped, tag = 'scoped memory for _fc_forward_padded.1']
    #allocation4 [shape = 's32[1]{0}', space=sflag, size = 0x4, scoped, tag = 'scoped memory for _fc_forward_padded.1']
    #allocation5 [shape = 'u8[32768]{0}', space=vmem, size = 0x8000, scoped, tag = 'input window, operand 1, single buffered']
    #allocation6 [shape = 's32[1]{0}', space=sflag, size = 0x4, scoped, tag = 'scoped memory for _fc_forward_padded.1']
    #allocation7 [shape = 'u8[512]{0}', space=vmem, size = 0x400, scoped, tag = 'input window, operand 2, single buffered']
    #allocation8 [shape = 'u8[32768]{0}', space=vmem, size = 0x8000, scoped, tag = 'input window, operand 3, single buffered']
    #allocation9 [shape = 's32[1]{0}', space=sflag, size = 0x4, scoped, tag = 'scoped memory for _fc_forward_padded.1']
    #allocation10 [shape = 'u8[512]{0}', space=vmem, size = 0x400, scoped, tag = 'input window, operand 4, single buffered']
    #allocation11 [shape = 'u8[4096]{0}', space=vmem, size = 0x1000, scoped, tag = 'output window, operand 0, single buffered']
    %10 = vsyncpa [#allocation3], 0
    %11 = vsyncpa [#allocation6], 0
    %12 = vsyncpa [#allocation9], 0
    %13 = vsyncpa [#allocation4], 0
    // Predicated region
    $region2: #{_fc_forward_padded.1} parent=1 // pred_check
      _
    $region3: #{_fc_forward_padded.1} parent=1 // pred_check_branch
      %15 = sbr.rel (0) target = $region5
    $region4: #{_fc_forward_padded.1} parent=1 // pred_region
      %s17 = ssub.s32 64, 64
      %18 = vsyncadd [#allocation3], %s17
      %s20 = sshll.u32 [#allocation2], 4
      %s21 = int_to_ptr.vmem [resolvable:$true] %s20
      %23 = dma.hbm_to_vmem [thread:$0]  %s0, 64, %s21, [#allocation3]
    $region5: #{_fc_forward_padded.1} parent=1 // pred_fallthru
      _
    // Predicated region
    $region6: #{_fc_forward_padded.1} parent=1 // pred_check
      _
    $region7: #{_fc_forward_padded.1} parent=1 // pred_check_branch
      %25 = sbr.rel (0) target = $region9
    $region8: #{_fc_forward_padded.1} parent=1 // pred_region
      %s27 = ssub.s32 1024, 1024
      %28 = vsyncadd [#allocation6], %s27
      %s29 = sshll.u32 [#allocation5], 4
      %s30 = int_to_ptr.vmem [resolvable:$true] %s29
      %35 = dma.hbm_to_vmem [thread:$0]  %s1, 1024, %s30, [#allocation6], 64, 64, 4
    $region9: #{_fc_forward_padded.1} parent=1 // pred_fallthru
      _
    // Predicated region
    $region10: #{_fc_forward_padded.1} parent=1 // pred_check
      _
    $region11: #{_fc_forward_padded.1} parent=1 // pred_check_branch
      %37 = sbr.rel (0) target = $region13
    $region12: #{_fc_forward_padded.1} parent=1 // pred_region
      %s39 = ssub.s32 16, 16
      %40 = vsyncadd [#allocation6], %s39
      %s42 = sshll.u32 [#allocation7], 4
      %s43 = int_to_ptr.vmem [resolvable:$true] %s42
      %45 = dma.hbm_to_vmem [thread:$0]  %s2, 16, %s43, [#allocation6]
    $region13: #{_fc_forward_padded.1} parent=1 // pred_fallthru
      _
    // Predicated region
    $region14: #{_fc_forward_padded.1} parent=1 // pred_check
      _
    $region15: #{_fc_forward_padded.1} parent=1 // pred_check_branch
      %47 = sbr.rel (0) target = $region17
    $region16: #{_fc_forward_padded.1} parent=1 // pred_region
      %s49 = ssub.s32 1024, 1024
      %50 = vsyncadd [#allocation9], %s49
      %s51 = sshll.u32 [#allocation8], 4
      %s52 = int_to_ptr.vmem [resolvable:$true] %s51
      %57 = dma.hbm_to_vmem [thread:$0]  %s3, 1024, %s52, [#allocation9], 64, 64, 4
    $region17: #{_fc_forward_padded.1} parent=1 // pred_fallthru
      _
    // Predicated region
    $region18: #{_fc_forward_padded.1} parent=1 // pred_check
      _
    $region19: #{_fc_forward_padded.1} parent=1 // pred_check_branch
      %59 = sbr.rel (0) target = $region21
    $region20: #{_fc_forward_padded.1} parent=1 // pred_region
      %s61 = ssub.s32 16, 16
      %62 = vsyncadd [#allocation9], %s61
      %s64 = sshll.u32 [#allocation10], 4
      %s65 = int_to_ptr.vmem [resolvable:$true] %s64
      %67 = dma.hbm_to_vmem [thread:$0]  %s4, 16, %s65, [#allocation9]
    $region21: #{_fc_forward_padded.1} parent=1 // pred_fallthru
      _
    // Predicated region
    $region22: #{_fc_forward_padded.1} parent=1 // pred_check
      _
    $region23: #{_fc_forward_padded.1} parent=1 // pred_check_branch
      %69 = sbr.rel (0) target = $region25
    $region24: #{_fc_forward_padded.1} parent=1 // pred_region
      %70 = dma.done [#allocation3], 64
    $region25: #{_fc_forward_padded.1} parent=1 // pred_fallthru
      _
    // Predicated region
    $region26: #{_fc_forward_padded.1} parent=1 // pred_check
      _
    $region27: #{_fc_forward_padded.1} parent=1 // pred_check_branch
      %72 = sbr.rel (0) target = $region29
    $region28: #{_fc_forward_padded.1} parent=1 // pred_region
      %73 = dma.done [#allocation6], 1024
    $region29: #{_fc_forward_padded.1} parent=1 // pred_fallthru
      _
    // Predicated region
    $region30: #{_fc_forward_padded.1} parent=1 // pred_check
      _
    $region31: #{_fc_forward_padded.1} parent=1 // pred_check_branch
      %75 = sbr.rel (0) target = $region33
    $region32: #{_fc_forward_padded.1} parent=1 // pred_region
      %76 = dma.done [#allocation6], 16
    $region33: #{_fc_forward_padded.1} parent=1 // pred_fallthru
      _
    // Predicated region
    $region34: #{_fc_forward_padded.1} parent=1 // pred_check
      _
    $region35: #{_fc_forward_padded.1} parent=1 // pred_check_branch
      %78 = sbr.rel (0) target = $region37
    $region36: #{_fc_forward_padded.1} parent=1 // pred_region
      %79 = dma.done [#allocation9], 1024
    $region37: #{_fc_forward_padded.1} parent=1 // pred_fallthru
      _
    // Predicated region
    $region38: #{_fc_forward_padded.1} parent=1 // pred_check
      _
    $region39: #{_fc_forward_padded.1} parent=1 // pred_check_branch
      %81 = sbr.rel (0) target = $region41
    $region40: #{_fc_forward_padded.1} parent=1 // pred_region
      %82 = dma.done [#allocation9], 16
    $region41: #{_fc_forward_padded.1} parent=1 // pred_fallthru
      _
    %p84 = scmp.eq.s32.totalorder 0, 0
    // Predicated region
    $region42: #{_fc_forward_padded.1} parent=1 // pred_check
      %p85 = pneg %p84
    $region43: #{_fc_forward_padded.1} parent=1 // pred_check_branch
      %87 = sbr.rel (%p85) target = $region45
    $region44: #{_fc_forward_padded.1} parent=1 // pred_region
      %v88 = vld [vmem:[#allocation10] sm:$0x1]
      %v90 = vlaneseq
      %v91 = vshrl.u32 %v90, 7
      %v92 = vsub.s32 0, %v91
      %v93 = vrot.slane %v88, %v92
      %95 = vst [vmem:[#allocation11] sm:$0xff] %v93
    $region45: #{_fc_forward_padded.1} parent=1 // pred_fallthru
      _
    %v96 = vld [vmem:[#allocation2] sm:$0xf]
    %v97 = vld [vmem:[#allocation5] sm:$0xf]
    %v98 = vld [vmem:[#allocation5 + $0x4] sm:$0xf]
    %v99 = vld [vmem:[#allocation5 + $0x8] sm:$0xf]
    %v100 = vld [vmem:[#allocation5 + $0xc] sm:$0xf]
    %v101 = vld [vmem:[#allocation5 + $0x10] sm:$0xf]
    %v102 = vld [vmem:[#allocation5 + $0x14] sm:$0xf]
    %v103 = vld [vmem:[#allocation5 + $0x18] sm:$0xf]
    %v104 = vld [vmem:[#allocation5 + $0x1c] sm:$0xf]
    %v105 = vld [vmem:[#allocation5 + $0x20] sm:$0xf]
    %v106 = vld [vmem:[#allocation5 + $0x24] sm:$0xf]
    %v107 = vld [vmem:[#allocation5 + $0x28] sm:$0xf]
    %v108 = vld [vmem:[#allocation5 + $0x2c] sm:$0xf]
    %v109 = vld [vmem:[#allocation5 + $0x30] sm:$0xf]
    %v110 = vld [vmem:[#allocation5 + $0x34] sm:$0xf]
    %v111 = vld [vmem:[#allocation5 + $0x38] sm:$0xf]
    %v112 = vld [vmem:[#allocation5 + $0x3c] sm:$0xf]
    %v113 = vld [vmem:[#allocation7] sm:$0x1]
    %v115 = vlaneseq
    %v116 = vshrl.u32 %v115, 7
    %v117 = vsub.s32 0, %v116
    %v118 = vrot.slane %v113, %v117
    %v136 = vunpack.c.l.b16 %v97
    %v137 = vunpack.c.l.b16 %v98
    %v138 = vunpack.c.l.b16 %v99
    %v139 = vunpack.c.l.b16 %v100
    %v140 = vunpack.c.l.b16 %v101
    %v141 = vunpack.c.l.b16 %v102
    %v142 = vunpack.c.l.b16 %v103
    %v143 = vunpack.c.l.b16 %v104
    %v144 = vunpack.c.l.b16 %v105
    %v145 = vunpack.c.l.b16 %v106
    %v146 = vunpack.c.l.b16 %v107
    %v147 = vunpack.c.l.b16 %v108
    %v148 = vunpack.c.l.b16 %v109
    %v149 = vunpack.c.l.b16 %v110
    %v150 = vunpack.c.l.b16 %v111
    %v151 = vunpack.c.l.b16 %v112
    %v152 = vpack.c.b16 %v137, %v136
    %v153 = vpack.c.b16 %v139, %v138
    %v154 = vpack.c.b16 %v141, %v140
    %v155 = vpack.c.b16 %v143, %v142
    %v156 = vpack.c.b16 %v145, %v144
    %v157 = vpack.c.b16 %v147, %v146
    %v158 = vpack.c.b16 %v149, %v148
    %v159 = vpack.c.b16 %v151, %v150
    %168 = vmatprep.subr.bf16.mxu0 0
    %169 = vmatpush1.bf16.msra.mxu0 %v152
    %170 = vmatprep.subr.bf16.mxu0 0
    %171 = vmatpush1.bf16.msra.mxu0 %v153
    %172 = vmatprep.subr.bf16.mxu0 0
    %173 = vmatpush1.bf16.msra.mxu0 %v154
    %174 = vmatprep.subr.bf16.mxu0 0
    %175 = vmatpush1.bf16.msra.mxu0 %v155
    %176 = vmatprep.subr.bf16.mxu0 0
    %177 = vmatpush1.bf16.msra.mxu0 %v156
    %178 = vmatprep.subr.bf16.mxu0 0
    %179 = vmatpush1.bf16.msra.mxu0 %v157
    %180 = vmatprep.subr.bf16.mxu0 0
    %181 = vmatpush1.bf16.msra.mxu0 %v158
    %182 = vmatprep.subr.bf16.mxu0 0
    %183 = vmatpush1.bf16.msra.mxu0 %v159
    %184 = vmatprep.subr.bf16.mxu0 0
    %185 = vmatpush1.bf16.msra.mxu0 0
    %186 = vmatprep.subr.bf16.mxu0 0
    %187 = vmatpush1.bf16.msra.mxu0 0
    %188 = vmatprep.subr.bf16.mxu0 0
    %189 = vmatpush1.bf16.msra.mxu0 0
    %190 = vmatprep.subr.bf16.mxu0 0
    %191 = vmatpush1.bf16.msra.mxu0 0
    %192 = vmatprep.subr.bf16.mxu0 0
    %193 = vmatpush1.bf16.msra.mxu0 0
    %194 = vmatprep.subr.bf16.mxu0 0
    %195 = vmatpush1.bf16.msra.mxu0 0
    %196 = vmatprep.subr.bf16.mxu0 0
    %197 = vmatpush1.bf16.msra.mxu0 0
    %198 = vmatprep.subr.bf16.mxu0 0
    %199 = vmatpush1.bf16.msra.mxu0 0
    %200 = vmatprep.mubr.bf16.mxu0 0
    %201 = vmatmul.mubr.bf16.gmra.mrb[0].mxu0 %v96
    %v202 = vpop.f32.mrb[0].mxu0
    %v203 = vadd.f32 %v118, %v202
    %v204 = vpop.f32.mrb[0].mxu0
    %v205 = vpop.f32.mrb[0].mxu0
    %v206 = vpop.f32.mrb[0].mxu0
    %207 = vdwg.mxu0
    %v208 = vmax.f32 %v203, 0.0
    %v209 = vld [vmem:[#allocation11] sm:$0xff]
    %v210 = vpack.c.bf16 %v208, %v208
    %v211 = vld [vmem:[#allocation8] sm:$0xf]
    %v212 = vld [vmem:[#allocation8 + $0x4] sm:$0xf]
    %v213 = vld [vmem:[#allocation8 + $0x8] sm:$0xf]
    %v214 = vld [vmem:[#allocation8 + $0xc] sm:$0xf]
    %v215 = vld [vmem:[#allocation8 + $0x10] sm:$0xf]
    %v216 = vld [vmem:[#allocation8 + $0x14] sm:$0xf]
    %v217 = vld [vmem:[#allocation8 + $0x18] sm:$0xf]
    %v218 = vld [vmem:[#allocation8 + $0x1c] sm:$0xf]
    %v219 = vld [vmem:[#allocation8 + $0x20] sm:$0xf]
    %v220 = vld [vmem:[#allocation8 + $0x24] sm:$0xf]
    %v221 = vld [vmem:[#allocation8 + $0x28] sm:$0xf]
    %v222 = vld [vmem:[#allocation8 + $0x2c] sm:$0xf]
    %v223 = vld [vmem:[#allocation8 + $0x30] sm:$0xf]
    %v224 = vld [vmem:[#allocation8 + $0x34] sm:$0xf]
    %v225 = vld [vmem:[#allocation8 + $0x38] sm:$0xf]
    %v226 = vld [vmem:[#allocation8 + $0x3c] sm:$0xf]
    %v243 = vunpack.c.l.b16 %v211
    %v244 = vunpack.c.l.b16 %v212
    %v245 = vunpack.c.l.b16 %v213
    %v246 = vunpack.c.l.b16 %v214
    %v247 = vunpack.c.l.b16 %v215
    %v248 = vunpack.c.l.b16 %v216
    %v249 = vunpack.c.l.b16 %v217
    %v250 = vunpack.c.l.b16 %v218
    %v251 = vunpack.c.l.b16 %v219
    %v252 = vunpack.c.l.b16 %v220
    %v253 = vunpack.c.l.b16 %v221
    %v254 = vunpack.c.l.b16 %v222
    %v255 = vunpack.c.l.b16 %v223
    %v256 = vunpack.c.l.b16 %v224
    %v257 = vunpack.c.l.b16 %v225
    %v258 = vunpack.c.l.b16 %v226
    %v259 = vpack.c.b16 %v244, %v243
    %v260 = vpack.c.b16 %v246, %v245
    %v261 = vpack.c.b16 %v248, %v247
    %v262 = vpack.c.b16 %v250, %v249
    %v263 = vpack.c.b16 %v252, %v251
    %v264 = vpack.c.b16 %v254, %v253
    %v265 = vpack.c.b16 %v256, %v255
    %v266 = vpack.c.b16 %v258, %v257
    %275 = vmatprep.subr.bf16.mxu0 0
    %276 = vmatpush1.bf16.msra.mxu0 %v259
    %277 = vmatprep.subr.bf16.mxu0 0
    %278 = vmatpush1.bf16.msra.mxu0 %v260
    %279 = vmatprep.subr.bf16.mxu0 0
    %280 = vmatpush1.bf16.msra.mxu0 %v261
    %281 = vmatprep.subr.bf16.mxu0 0
    %282 = vmatpush1.bf16.msra.mxu0 %v262
    %283 = vmatprep.subr.bf16.mxu0 0
    %284 = vmatpush1.bf16.msra.mxu0 %v263
    %285 = vmatprep.subr.bf16.mxu0 0
    %286 = vmatpush1.bf16.msra.mxu0 %v264
    %287 = vmatprep.subr.bf16.mxu0 0
    %288 = vmatpush1.bf16.msra.mxu0 %v265
    %289 = vmatprep.subr.bf16.mxu0 0
    %290 = vmatpush1.bf16.msra.mxu0 %v266
    %291 = vmatprep.subr.bf16.mxu0 0
    %292 = vmatpush1.bf16.msra.mxu0 0
    %293 = vmatprep.subr.bf16.mxu0 0
    %294 = vmatpush1.bf16.msra.mxu0 0
    %295 = vmatprep.subr.bf16.mxu0 0
    %296 = vmatpush1.bf16.msra.mxu0 0
    %297 = vmatprep.subr.bf16.mxu0 0
    %298 = vmatpush1.bf16.msra.mxu0 0
    %299 = vmatprep.subr.bf16.mxu0 0
    %300 = vmatpush1.bf16.msra.mxu0 0
    %301 = vmatprep.subr.bf16.mxu0 0
    %302 = vmatpush1.bf16.msra.mxu0 0
    %303 = vmatprep.subr.bf16.mxu0 0
    %304 = vmatpush1.bf16.msra.mxu0 0
    %305 = vmatprep.subr.bf16.mxu0 0
    %306 = vmatpush1.bf16.msra.mxu0 0
    %307 = vmatprep.mubr.bf16.mxu0 0
    %308 = vmatmul.mubr.bf16.gmra.mrb[0].mxu0 %v210
    %v309 = vpop.f32.mrb[0].mxu0
    %v310 = vadd.f32 0.0, %v309
    %v311 = vpop.f32.mrb[0].mxu0
    %v312 = vpop.f32.mrb[0].mxu0
    %v313 = vpop.f32.mrb[0].mxu0
    %314 = vdwg.mxu0
    %v315 = vadd.f32 %v209, %v310
    %316 = vst [vmem:[#allocation11] sm:$0xff] %v315
    // Predicated region
    $region46: #{_fc_forward_padded.1} parent=1 // pred_check
      _
    $region47: #{_fc_forward_padded.1} parent=1 // pred_check_branch
      %318 = sbr.rel (0) target = $region49
    $region48: #{_fc_forward_padded.1} parent=1 // pred_region
      %s320 = ssub.s32 128, 128
      %321 = vsyncadd [#allocation4], %s320
      %s323 = sshll.u32 [#allocation11], 4
      %s324 = int_to_ptr.vmem [resolvable:$true] %s323
      %326 = dma.vmem_to_hbm [thread:$0]  %s324, 128, %s5, [#allocation4]
    $region49: #{_fc_forward_padded.1} parent=1 // pred_fallthru
      _
    // Predicated region
    $region50: #{_fc_forward_padded.1} parent=1 // pred_check
      _
    $region51: #{_fc_forward_padded.1} parent=1 // pred_check_branch
      %328 = sbr.rel (0) target = $region53
    $region52: #{_fc_forward_padded.1} parent=1 // pred_region
      %329 = dma.done [#allocation4], 128
    $region53: #{_fc_forward_padded.1} parent=1 // pred_fallthru
      _
    %330 = vsyncpa [#allocation3], 1
    %331 = vsyncpa [#allocation6], 1
    %332 = vsyncpa [#allocation9], 1
    %333 = vsyncpa [#allocation4], 1

</llo_original>
